<compile_context>
chip_gen: v5e
topology: v5e:2x2
jax: 0.10.0
libtpu: 0.0.40
codegen_flags: <defaults>
</compile_context>

<pallas_src>
import jax
import jax.numpy as jnp
from jax import lax
from jax.experimental import pallas as pl
from jax.experimental.pallas import tpu as pltpu


def _round_up(x: int, m: int) -> int:
    return ((x + m - 1) // m) * m


def _vmem_capacity_bytes() -> int:
    try:
        info = pltpu.get_tpu_info()
        cap = getattr(info, "vmem_capacity_bytes", None)
        if cap:
            return int(cap)
    except Exception:
        pass
    return 64 << 20  # conservative fallback: v7x per-TensorCore VMEM


# ---------------------------------------------------------------------------
# Pallas kernel: out = x - (x @ c.T) @ c  for one batch tile (rows of x).
# ---------------------------------------------------------------------------
def _make_pc_removal_kernel(n_components: int, use_mxu: bool):
    def kernel(x_ref, c_ref, o_ref):
        x = x_ref[...]
        xf = x if x.dtype == jnp.float32 else x.astype(jnp.float32)
        c = c_ref[...]                                    # [n_rows, D] f32
        if use_mxu:
            # Rank large enough for the MXU.  Contract x's last dim against
            # c's last dim directly -> no in-kernel c.T (XLU) per tile.
            proj = lax.dot_general(
                xf, c, (((1,), (1,)), ((), ())),
                preferred_element_type=jnp.float32)       # [tb, n_rows]
            removed = jnp.dot(proj, c,
                              preferred_element_type=jnp.float32)  # [tb, D]
        else:
            # Small n (default 1): VPU multiply + XLU lane reduce; fused,
            # no zero-init accumulator.
            c0 = c[0:1, :]
            removed = jnp.sum(xf * c0, axis=-1, keepdims=True) * c0
            for k in range(1, n_components):              # static, tiny
                ck = c[k:k + 1, :]
                removed = removed + jnp.sum(xf * ck, axis=-1, keepdims=True) * ck
        o_ref[...] = (xf - removed).astype(o_ref.dtype)

    return kernel


def _pick_tile_rows(batch: int, d: int, itemsize: int, vmem_capacity: int) -> int:
    """Rows per tile.  Live VMEM = 2x in-tiles + 2x out-tiles + components;
    keep the total well under the per-core capacity (64 MiB/TC on v7x,
    128 MiB on v5e/v6e), and guarantee enough grid steps for pipelining /
    two-TensorCore sharding."""
    total_budget = min(max(vmem_capacity // 4, 8 << 20), 24 << 20)
    per_buffer = total_budget // 4
    row_bytes = max(1, d * itemsize)
    tb = max(8, (per_buffer // row_bytes) // 8 * 8)
    tb = min(tb, 1024)                      # diminishing returns past ~1k rows
    min_steps = 8                           # >= 2x the single-TC pipeline floor
    if batch >= min_steps * 8:
        tb = min(tb, max(8, _round_up(pl.cdiv(batch, min_steps), 8)))
    if tb >= batch:
        return batch                        # one tile spanning the full batch
    return tb


# ---------------------------------------------------------------------------
# Component estimation (plain JAX; mirrors the PyTorch .detach()).
# ---------------------------------------------------------------------------
def _estimate_components(embeddings: jax.Array, n_components: int,
                         method: str = "power", iters: int = 48) -> jax.Array:
    # TODO(synk): SVD / subspace iteration are iterative linear algebra with no
    # clean Pallas equivalent; they stay in plain JAX.
    emb = lax.stop_gradient(embeddings.astype(jnp.float32))
    B, D = emb.shape
    n = min(n_components, B, D)
    if method == "svd":
        _, _, vT = jnp.linalg.svd(emb, full_matrices=False)
        return vT[:n]
    # Block power (subspace) iteration: O(iters * B * D * n) dense MXU matvecs
    # instead of an O(min(B,D)^3) decomposition.  Any orthonormal basis of the
    # top-n right singular subspace yields the identical removal projector.
    key = jax.random.PRNGKey(0)
    v = jax.random.normal(key, (D, n), dtype=jnp.float32)
    v, _ = jnp.linalg.qr(v)

    def body(_, v):
        w = emb.T @ (emb @ v)
        q, _ = jnp.linalg.qr(w)
        return q

    v = lax.fori_loop(0, iters, body, v)
    return v.T                                            # [n, D]


# ---------------------------------------------------------------------------
# Public wrapper = BatchPCRemoval.forward on the 'sentence_embedding' entry.
# ---------------------------------------------------------------------------
def batch_pc_removal(embeddings: jax.Array,
                     n_components: int = 1,
                     components_method: str = "power") -> jax.Array:
    B, D = embeddings.shape
    if n_components <= 0:
        return embeddings
    n_eff = min(n_components, B, D)

    components = _estimate_components(embeddings, n_eff, components_method)
    components = components.astype(jnp.float32)           # stay f32

    use_mxu = n_eff > 8
    if use_mxu:
        # Pad component *rows* to a multiple of 8 (zero rows contribute nothing
        # to the projection); lanes stay at full D so x needs no padding and
        # the output needs no slice.
        n_rows = _round_up(n_eff, 8)
        if n_rows != n_eff:
            components = jnp.pad(components, ((0, n_rows - n_eff), (0, 0)))
    else:
        n_rows = n_eff

    itemsize = jnp.dtype(embeddings.dtype).itemsize
    vmem_capacity = _vmem_capacity_bytes()
    tb = _pick_tile_rows(B, D, itemsize, vmem_capacity)
    steps = pl.cdiv(B, tb)

    return pl.pallas_call(
        _make_pc_removal_kernel(n_eff, use_mxu),
        out_shape=jax.ShapeDtypeStruct((B, D), embeddings.dtype),
        grid_spec=pltpu.PrefetchScalarGridSpec(
            num_scalar_prefetch=0,
            grid=(steps,),
            in_specs=[
                pl.BlockSpec((tb, D), lambda i: (i, 0)),      # batch-tiled, full D
                pl.BlockSpec((n_rows, D), lambda i: (0, 0)),  # resident components
            ],
            out_specs=pl.BlockSpec((tb, D), lambda i: (i, 0)),
        ),
        compiler_params=pltpu.CompilerParams(
            dimension_semantics=("parallel",),                # megacore on v7x
            vmem_limit_bytes=int(min(max(vmem_capacity // 2, 32 << 20), 64 << 20)),
        ),
    )(embeddings, components)


def batch_pc_removal_ref(embeddings: jax.Array, n_components: int = 1) -> jax.Array:
    """Pure-JAX reference mirroring the PyTorch module (true SVD)."""
    emb = embeddings.astype(jnp.float32)
    _, _, vT = jnp.linalg.svd(emb, full_matrices=False)
    components = vT[:n_components]
    projection = jnp.matmul(emb, components.T, precision=lax.Precision.HIGHEST)
    removed = jnp.matmul(projection, components, precision=lax.Precision.HIGHEST)
    return (emb - removed).astype(embeddings.dtype)


if __name__ == "__main__":
    key = jax.random.PRNGKey(0)
    k1, k2 = jax.random.split(key)

    # ---- Case 1: module defaults (n_components=1) -> VPU rank-1 removal ----
    B, D, n = 8, 32, 1
    emb = jax.random.normal(k1, (B, D), dtype=jnp.float32)
    ref = batch_pc_removal_ref(emb, n_components=n)

    # Strict-parity path: same SVD components as the PyTorch module.
    out_svd = jax.block_until_ready(
        batch_pc_removal(emb, n_components=n, components_method="svd"))
    assert out_svd.shape == (B, D)
    assert jnp.allclose(out_svd, ref, atol=1e-4, rtol=1e-4), "svd path mismatch"

    # Default fast path: subspace-iteration components + the same Pallas kernel.
    # Verify the kernel against a pure-JAX removal using the SAME components.
    comps = _estimate_components(emb, n, method="power")
    ref_power = (emb - jnp.matmul(
        jnp.matmul(emb, comps.T, precision=lax.Precision.HIGHEST),
        comps, precision=lax.Precision.HIGHEST)).astype(emb.dtype)
    out_power = jax.block_until_ready(batch_pc_removal(emb, n_components=n))
    assert jnp.allclose(out_power, ref_power, atol=1e-4, rtol=1e-4), \
        "power path mismatch vs same-components reference"

    # ---- Case 2: n_components > 8 -> MXU removal path ----
    B2, D2, n2 = 16, 256, 10
    emb2 = jax.random.normal(k2, (B2, D2), dtype=jnp.float32)
    ref2 = batch_pc_removal_ref(emb2, n_components=n2)
    out2 = jax.block_until_ready(
        batch_pc_removal(emb2, n_components=n2, components_method="svd"))
    assert jnp.allclose(out2, ref2, atol=2e-2, rtol=2e-2), "mxu path mismatch"

    print("KERNEL_OK")
</pallas_src>

<mosaic_0001>
module attributes {stable_mosaic.version = 11 : i64} {
  func.func @kernel(%arg0: i32, %arg1: memref<8x32xf32, #tpu.memory_space<vmem>>, %arg2: memref<1x32xf32, #tpu.memory_space<vmem>>, %arg3: memref<8x32xf32, #tpu.memory_space<vmem>>) attributes {dimension_semantics = [#tpu.dimension_semantics<parallel>], iteration_bounds = array<i64: 1>, scalar_prefetch = 0 : i64, scratch_operands = 0 : i64, tpu.core_type = #tpu.core_type<tc>, window_params = [{transform_indices = @transform_0, window_bounds = array<i64: 8, 32>}, {pipeline_mode = #tpu.pipeline_mode<synchronous>, transform_indices = @transform_1, window_bounds = array<i64: 1, 32>}, {transform_indices = @transform_2, window_bounds = array<i64: 8, 32>}]} {
    %c0 = arith.constant 0 : index
    %c0_0 = arith.constant 0 : index
    %0 = vector.load %arg1[%c0, %c0_0] : memref<8x32xf32, #tpu.memory_space<vmem>>, vector<8x32xf32>
    %c0_1 = arith.constant 0 : index
    %c0_2 = arith.constant 0 : index
    %1 = vector.load %arg2[%c0_1, %c0_2] : memref<1x32xf32, #tpu.memory_space<vmem>>, vector<1x32xf32>
    %2 = vector.broadcast %1 : vector<1x32xf32> to vector<8x32xf32>
    %3 = arith.mulf %0, %2 : vector<8x32xf32>
    %cst = arith.constant dense<0.000000e+00> : vector<8xf32>
    %4 = vector.multi_reduction <add>, %3, %cst [1] : vector<8x32xf32> to vector<8xf32>
    %5 = vector.shape_cast %4 : vector<8xf32> to vector<8x1xf32>
    %6 = vector.broadcast %5 : vector<8x1xf32> to vector<8x32xf32>
    %7 = vector.broadcast %1 : vector<1x32xf32> to vector<8x32xf32>
    %8 = arith.mulf %6, %7 : vector<8x32xf32>
    %9 = arith.subf %0, %8 : vector<8x32xf32>
    %c0_3 = arith.constant 0 : index
    %c0_4 = arith.constant 0 : index
    %10 = vector.load %arg3[%c0_3, %c0_4] : memref<8x32xf32, #tpu.memory_space<vmem>>, vector<8x32xf32>
    tpu.vector_store %arg3[%c0_3, %c0_4], %9 {strides = array<i32>} : memref<8x32xf32, #tpu.memory_space<vmem>>, vector<8x32xf32>,
    return
  }
  func.func @transform_0(%arg0: i32) -> (i32, i32) {
    %c0_i32 = arith.constant 0 : i32
    %c0_i32_0 = arith.constant 0 : i32
    return %arg0, %c0_i32 : i32, i32
  }
  func.func @transform_1(%arg0: i32) -> (i32, i32) {
    %c0_i32 = arith.constant 0 : i32
    %c0_i32_0 = arith.constant 0 : i32
    %c0_i32_1 = arith.constant 0 : i32
    return %c0_i32, %c0_i32_0 : i32, i32
  }
  func.func @transform_2(%arg0: i32) -> (i32, i32) {
    %c0_i32 = arith.constant 0 : i32
    %c0_i32_0 = arith.constant 0 : i32
    return %arg0, %c0_i32 : i32, i32
  }
}

</mosaic_0001>

<llo_original>
// kernel: tpu_custom_call.1
$region0: #{tpu_custom_call.1}
  #allocation0 [shape = 'u32[]', space=smem, size = 0x4, offset = 0x4, fixed_abs, tag = 'smem constant byte address 0x4 - core index']
  #allocation1 [shape = 'u32[72,128]{1,0:T(1,128)}', space=vmem, size = 0x9000, scoped, tag = 'internal scratch']
  %s0 = inlined_call_operand.hbm [shape: f32[8,32], index: 0, kind: input, shape index: {}]
  %s1 = inlined_call_operand.hbm [shape: f32[1,32], index: 1, kind: input, shape index: {}]
  %s2 = inlined_call_operand.hbm [shape: f32[8,32], index: 2, kind: output, shape index: {}]
  %s3 = sld [smem:[#allocation0]]
  $region26: #{tpu_custom_call.1} parent=0
    _
  %s5 = ssub.s32 1, %s3
  %s6 = scalar_select 0, %s5, %s3
  $region1: #{tpu_custom_call.1} parent=0
    #allocation2 [shape = 'u8[4096]{0}', space=vmem, size = 0x1000, scoped, tag = 'input window, operand 0, single buffered']
    #allocation3 [shape = 's32[1]{0}', space=sflag, size = 0x4, scoped, tag = 'scoped memory for tpu_custom_call.1']
    #allocation4 [shape = 's32[1]{0}', space=sflag, size = 0x4, scoped, tag = 'scoped memory for tpu_custom_call.1']
    #allocation5 [shape = 'u8[512]{0}', space=vmem, size = 0x400, scoped, tag = 'input window, operand 1, single buffered']
    #allocation6 [shape = 's32[1]{0}', space=sflag, size = 0x4, scoped, tag = 'scoped memory for tpu_custom_call.1']
    #allocation7 [shape = 'u8[4096]{0}', space=vmem, size = 0x1000, scoped, tag = 'output window, operand 0, single buffered']
    %7 = vsyncpa [#allocation3], 0
    %8 = vsyncpa [#allocation6], 0
    %9 = vsyncpa [#allocation4], 0
    // Predicated region
    $region2: #{tpu_custom_call.1} parent=1 // pred_check
      _
    $region3: #{tpu_custom_call.1} parent=1 // pred_check_branch
      %11 = sbr.rel (0) target = $region5
    $region4: #{tpu_custom_call.1} parent=1 // pred_region
      %13 = vsyncadd [#allocation3], 0
      %s15 = sshll.u32 %s0, 4
      %s16 = int_to_ptr.hbm [resolvable:$true] %s15
      %s17 = sshll.u32 [#allocation2], 4
      %s18 = int_to_ptr.vmem [resolvable:$true] %s17
      %20 = dma.hbm_to_vmem [thread:$0]  %s16, 128, %s18, [#allocation3]
    $region5: #{tpu_custom_call.1} parent=1 // pred_fallthru
      _
    // Predicated region
    $region6: #{tpu_custom_call.1} parent=1 // pred_check
      _
    $region7: #{tpu_custom_call.1} parent=1 // pred_check_branch
      %22 = sbr.rel (0) target = $region9
    $region8: #{tpu_custom_call.1} parent=1 // pred_region
      %24 = vsyncadd [#allocation6], 0
      %s26 = sshll.u32 %s1, 4
      %s27 = int_to_ptr.hbm [resolvable:$true] %s26
      %s28 = sshll.u32 [#allocation5], 4
      %s29 = int_to_ptr.vmem [resolvable:$true] %s28
      %31 = dma.hbm_to_vmem [thread:$0]  %s27, 16, %s29, [#allocation6]
    $region9: #{tpu_custom_call.1} parent=1 // pred_fallthru
      _
    // Predicated region
    $region10: #{tpu_custom_call.1} parent=1 // pred_check
      _
    $region11: #{tpu_custom_call.1} parent=1 // pred_check_branch
      %33 = sbr.rel (0) target = $region13
    $region12: #{tpu_custom_call.1} parent=1 // pred_region
      %35 = dma.done [#allocation3], 128
    $region13: #{tpu_custom_call.1} parent=1 // pred_fallthru
      _
    // Predicated region
    $region14: #{tpu_custom_call.1} parent=1 // pred_check
      _
    $region15: #{tpu_custom_call.1} parent=1 // pred_check_branch
      %37 = sbr.rel (0) target = $region17
    $region16: #{tpu_custom_call.1} parent=1 // pred_region
      %39 = dma.done [#allocation6], 16
    $region17: #{tpu_custom_call.1} parent=1 // pred_fallthru
      _
    %v40 = vld [vmem:[#allocation2] sm:$0xff]
    %v41 = vld [vmem:[#allocation5] sm:$0x1]
    %v43 = vperm.slane %v41, 0
    %v45 = vmul.f32 %v40, %v43
    %vm46 = vcmask 261120
    %v47 = vsel %vm46, %v45, 0.0
    %48 = vadd.xlane.f32.xlu0 %v47
    %v49 = vpop.xlane.xlu0 %48
    %v50 = vmul.f32 %v49, %v43
    %v51 = vsub.f32 %v40, %v50
    %52 = vst.msk [vmem:[#allocation7] sm:$0xff] %vm46, %v51
    // Predicated region
    $region18: #{tpu_custom_call.1} parent=1 // pred_check
      _
    $region19: #{tpu_custom_call.1} parent=1 // pred_check_branch
      %54 = sbr.rel (0) target = $region21
    $region20: #{tpu_custom_call.1} parent=1 // pred_region
      %56 = vsyncadd [#allocation4], 0
      %s58 = sshll.u32 [#allocation7], 4
      %s59 = int_to_ptr.vmem [resolvable:$true] %s58
      %s60 = sshll.u32 %s2, 4
      %s61 = int_to_ptr.hbm [resolvable:$true] %s60
      %63 = dma.vmem_to_hbm [thread:$0]  %s59, 128, %s61, [#allocation4]
    $region21: #{tpu_custom_call.1} parent=1 // pred_fallthru
      _
    // Predicated region
    $region22: #{tpu_custom_call.1} parent=1 // pred_check
      _
    $region23: #{tpu_custom_call.1} parent=1 // pred_check_branch
      %65 = sbr.rel (0) target = $region25
    $region24: #{tpu_custom_call.1} parent=1 // pred_region
      %67 = dma.done [#allocation4], 128
    $region25: #{tpu_custom_call.1} parent=1 // pred_fallthru
      _
    %68 = vsyncpa [#allocation3], 1
    %69 = vsyncpa [#allocation6], 1
    %70 = vsyncpa [#allocation4], 1

</llo_original>
